<compile_context>
chip_gen: v5e
topology: v5e:2x2
jax: 0.10.0
libtpu: 0.0.40
codegen_flags: <defaults>
</compile_context>

<pallas_src>
import functools

import jax
import jax.numpy as jnp
from jax.experimental import pallas as pl
from jax.experimental.pallas import tpu as pltpu

_LANE = 128


def _dice_kernel(x_ref, t_ref, num_ref, den_ref, *,
                 tile_rows, n_valid, need_mask):
    """Grid = (B, n_row_tiles); axis 1 walks row-tiles of one sample.

    x_ref, t_ref : (1, tile_rows, 128) tiles of logits / targets (caller dtype)
    num_ref      : (1, 1, 128) f32 lane-dense accumulator of sum(p * t)
    den_ref      : (1, 1, 128) f32 lane-dense accumulator of sum(p + t)

    The final cross-lane reduction and the dice formula are done in the
    wrapper on tiny (B, 128) arrays.
    """
    r = pl.program_id(1)

    @pl.when(r == 0)
    def _init():
        num_ref[...] = jnp.zeros_like(num_ref)
        den_ref[...] = jnp.zeros_like(den_ref)

    x = x_ref[0].astype(jnp.float32)          # (tile_rows, 128)
    t = t_ref[0].astype(jnp.float32)
    p = jax.nn.sigmoid(x)

    if need_mask:
        # Mask out padded / out-of-range elements of the ragged last tile.
        # `need_mask` / `n_valid` are trace-time constants, so this whole
        # block disappears for nicely shaped inputs. jnp.where also guards
        # against garbage (NaN/inf) in the out-of-bounds part of the tile.
        row = jax.lax.broadcasted_iota(jnp.int32, (tile_rows, _LANE), 0)
        col = jax.lax.broadcasted_iota(jnp.int32, (tile_rows, _LANE), 1)
        elem = (r * tile_rows + row) * _LANE + col
        valid = elem < n_valid
        p = jnp.where(valid, p, 0.0)
        t = jnp.where(valid, t, 0.0)

    # Sublane-direction partial sums only; lanes stay intact (cheap VPU adds,
    # no per-step cross-lane XLU reduction, no narrow masked stores).
    num_ref[...] += jnp.sum(p * t, axis=0, keepdims=True)[None]
    den_ref[...] += jnp.sum(p + t, axis=0, keepdims=True)[None]


@functools.partial(jax.jit, static_argnames=("reduction", "max_tile_rows"))
def dice_loss(inputs, targets, weights=None, reduction="mean",
              max_tile_rows=2048):
    """Pallas TPU dice loss. inputs/targets: any shape with leading batch dim."""
    B = inputs.shape[0]
    if targets.dtype == jnp.bool_:
        targets = targets.astype(inputs.dtype)

    x = inputs.reshape(B, -1)                 # metadata-only reshape
    t = targets.reshape(B, -1)
    n = x.shape[1]

    rows = pl.cdiv(n, _LANE)
    pad_cols = rows * _LANE - n
    if pad_cols:
        # Only needed when the flattened sample size is not a multiple of 128
        # (so the (B, rows, 128) view exists). Values are masked in-kernel.
        x = jnp.pad(x, ((0, 0), (0, pad_cols)))
        t = jnp.pad(t, ((0, 0), (0, pad_cols)))
    x3 = x.reshape(B, rows, _LANE)            # free when pad_cols == 0
    t3 = t.reshape(B, rows, _LANE)

    # Row-tile: either the whole sample (block dim == full dim is always
    # legal) or max_tile_rows (multiple of 8; ~1 MiB f32 per input tile).
    tile_rows = rows if rows <= max_tile_rows else max_tile_rows
    n_row_tiles = pl.cdiv(rows, tile_rows)
    need_mask = (n_row_tiles * tile_rows * _LANE) != n

    kernel = functools.partial(
        _dice_kernel, tile_rows=tile_rows, n_valid=n, need_mask=need_mask)

    num, den = pl.pallas_call(
        kernel,
        out_shape=(jax.ShapeDtypeStruct((B, 1, _LANE), jnp.float32),
                   jax.ShapeDtypeStruct((B, 1, _LANE), jnp.float32)),
        grid_spec=pltpu.PrefetchScalarGridSpec(
            num_scalar_prefetch=0,
            grid=(B, n_row_tiles),
            in_specs=[
                pl.BlockSpec((1, tile_rows, _LANE), lambda b, r: (b, r, 0)),
                pl.BlockSpec((1, tile_rows, _LANE), lambda b, r: (b, r, 0)),
            ],
            out_specs=[
                pl.BlockSpec((1, 1, _LANE), lambda b, r: (b, 0, 0)),
                pl.BlockSpec((1, 1, _LANE), lambda b, r: (b, 0, 0)),
            ],
        ),
        compiler_params=pltpu.CompilerParams(
            dimension_semantics=("parallel", "arbitrary"),
            vmem_limit_bytes=32 * 1024 * 1024),
    )(x3, t3)

    # Tiny finalize on (B, 128) arrays: one cross-lane reduce, dice formula,
    # weights and reduction — negligible next to the HBM-bound kernel.
    num_s = jnp.sum(num, axis=(1, 2))         # (B,)
    den_s = jnp.sum(den, axis=(1, 2))
    loss = 1.0 - (2.0 * num_s + 1.0) / (den_s + 1.0)
    if weights is not None:
        loss = loss * weights
    if reduction == "mean":
        return jnp.mean(loss)
    elif reduction == "sum":
        return jnp.sum(loss)
    return loss


def _dice_loss_ref(inputs, targets, weights=None, reduction="mean"):
    """Pure-JAX reference mirroring the PyTorch implementation."""
    B = inputs.shape[0]
    p = jax.nn.sigmoid(inputs.reshape(B, -1).astype(jnp.float32))
    t = targets.reshape(B, -1).astype(jnp.float32)
    num = 2.0 * jnp.sum(p * t, axis=1)
    den = jnp.sum(p, axis=1) + jnp.sum(t, axis=1)
    loss = 1.0 - (num + 1.0) / (den + 1.0)
    if weights is not None:
        loss = loss * weights
    if reduction == "mean":
        return jnp.mean(loss)
    elif reduction == "sum":
        return jnp.sum(loss)
    return loss


class DiceLoss:
    """Mirror of the PyTorch module: weights=None, reduction='mean' by default."""

    def __init__(self, weights=None, reduction="mean"):
        self.weights = weights
        self.reduction = reduction

    def __call__(self, inputs, targets):
        return dice_loss(inputs, targets, weights=self.weights,
                         reduction=self.reduction)


if __name__ == "__main__":
    key = jax.random.PRNGKey(0)

    # 1) NCHW inputs, N divisible by 128 (no pad, no mask path).
    k1, k2, key = (*jax.random.split(key, 2), key)
    x = jax.random.normal(k1, (2, 4, 16, 16), dtype=jnp.float32)
    tgt = jax.random.bernoulli(k2, p=0.3, shape=(2, 4, 16, 16)).astype(jnp.float32)
    out = jax.block_until_ready(DiceLoss()(x, tgt))
    ref = _dice_loss_ref(x, tgt)
    assert jnp.allclose(out, ref, atol=1e-5, rtol=1e-5), (out, ref)

    # weights + 'sum' reduction on the same inputs.
    w = jnp.array([0.3, 0.7], dtype=jnp.float32)
    out_w = jax.block_until_ready(dice_loss(x, tgt, weights=w, reduction="sum"))
    ref_w = _dice_loss_ref(x, tgt, weights=w, reduction="sum")
    assert jnp.allclose(out_w, ref_w, atol=1e-5, rtol=1e-5), (out_w, ref_w)

    # 2) Ragged sample size (N = 105, not a multiple of 128): pad + mask path.
    k1, k2, key = (*jax.random.split(key, 2), key)
    xr = jax.random.normal(k1, (2, 3, 7, 5), dtype=jnp.float32)
    tr = jax.random.bernoulli(k2, p=0.4, shape=(2, 3, 7, 5)).astype(jnp.float32)
    out_r = jax.block_until_ready(dice_loss(xr, tr))
    ref_r = _dice_loss_ref(xr, tr)
    assert jnp.allclose(out_r, ref_r, atol=1e-5, rtol=1e-5), (out_r, ref_r)

    # 3) rows not a multiple of 8 (block == full dim path), no pad needed.
    k1, k2, key = (*jax.random.split(key, 2), key)
    xo = jax.random.normal(k1, (2, 10, 128), dtype=jnp.float32)
    to = jax.random.bernoulli(k2, p=0.5, shape=(2, 10, 128)).astype(jnp.float32)
    out_o = jax.block_until_ready(dice_loss(xo, to, reduction="none"))
    ref_o = _dice_loss_ref(xo, to, reduction="none")
    assert jnp.allclose(out_o, ref_o, atol=1e-5, rtol=1e-5), (out_o, ref_o)

    print("KERNEL_OK")
</pallas_src>

<mosaic_0001>
module attributes {stable_mosaic.version = 11 : i64} {
  func.func @_dice_kernel(%arg0: i32, %arg1: i32, %arg2: memref<1x8x128xf32, #tpu.memory_space<vmem>>, %arg3: memref<1x8x128xf32, #tpu.memory_space<vmem>>, %arg4: memref<1x1x128xf32, #tpu.memory_space<vmem>>, %arg5: memref<1x1x128xf32, #tpu.memory_space<vmem>>) attributes {dimension_semantics = [#tpu.dimension_semantics<parallel>, #tpu.dimension_semantics<arbitrary>], iteration_bounds = array<i64: 2, 1>, scalar_prefetch = 0 : i64, scratch_operands = 0 : i64, tpu.core_type = #tpu.core_type<tc>, window_params = [{transform_indices = @transform_0, window_bounds = array<i64: 1, 8, 128>}, {transform_indices = @transform_1, window_bounds = array<i64: 1, 8, 128>}, {transform_indices = @transform_2, window_bounds = array<i64: 1, 1, 128>}, {transform_indices = @transform_3, window_bounds = array<i64: 1, 1, 128>}]} {
    %c0_i32 = arith.constant 0 : i32
    %0 = arith.cmpi eq, %arg1, %c0_i32 : i32
    %1 = arith.extui %0 : i1 to i32
    %c0_i32_0 = arith.constant 0 : i32
    %2 = arith.cmpi ne, %1, %c0_i32_0 : i32
    scf.if %2 {
      %cst_20 = arith.constant 0.000000e+00 : f32
      %26 = vector.broadcast %cst_20 : f32 to vector<1x1x128xf32>
      %c0_21 = arith.constant 0 : index
      %c0_22 = arith.constant 0 : index
      %c0_23 = arith.constant 0 : index
      %27 = vector.load %arg4[%c0_21, %c0_22, %c0_23] : memref<1x1x128xf32, #tpu.memory_space<vmem>>, vector<1x1x128xf32>
      tpu.vector_store %arg4[%c0_21, %c0_22, %c0_23], %26 {strides = array<i32>} : memref<1x1x128xf32, #tpu.memory_space<vmem>>, vector<1x1x128xf32>,
      %cst_24 = arith.constant 0.000000e+00 : f32
      %28 = vector.broadcast %cst_24 : f32 to vector<1x1x128xf32>
      %c0_25 = arith.constant 0 : index
      %c0_26 = arith.constant 0 : index
      %c0_27 = arith.constant 0 : index
      %29 = vector.load %arg5[%c0_25, %c0_26, %c0_27] : memref<1x1x128xf32, #tpu.memory_space<vmem>>, vector<1x1x128xf32>
      tpu.vector_store %arg5[%c0_25, %c0_26, %c0_27], %28 {strides = array<i32>} : memref<1x1x128xf32, #tpu.memory_space<vmem>>, vector<1x1x128xf32>,
    } else {
    }
    %c0 = arith.constant 0 : index
    %c0_1 = arith.constant 0 : index
    %c0_2 = arith.constant 0 : index
    %3 = vector.load %arg2[%c0, %c0_1, %c0_2] : memref<1x8x128xf32, #tpu.memory_space<vmem>>, vector<1x8x128xf32>
    %4 = vector.shape_cast %3 : vector<1x8x128xf32> to vector<8x128xf32>
    %c0_3 = arith.constant 0 : index
    %c0_4 = arith.constant 0 : index
    %c0_5 = arith.constant 0 : index
    %5 = vector.load %arg3[%c0_3, %c0_4, %c0_5] : memref<1x8x128xf32, #tpu.memory_space<vmem>>, vector<1x8x128xf32>
    %6 = vector.shape_cast %5 : vector<1x8x128xf32> to vector<8x128xf32>
    %7 = arith.negf %4 : vector<8x128xf32>
    %8 = math.exp %7 : vector<8x128xf32>
    %cst = arith.constant 1.000000e+00 : f32
    %9 = vector.broadcast %cst : f32 to vector<8x128xf32>
    %10 = arith.addf %9, %8 : vector<8x128xf32>
    %11 = arith.divf %9, %10 : vector<8x128xf32>
    %c0_6 = arith.constant 0 : index
    %c0_7 = arith.constant 0 : index
    %c0_8 = arith.constant 0 : index
    %12 = vector.load %arg4[%c0_6, %c0_7, %c0_8] : memref<1x1x128xf32, #tpu.memory_space<vmem>>, vector<1x1x128xf32>
    %13 = arith.mulf %11, %6 : vector<8x128xf32>
    %cst_9 = arith.constant dense<0.000000e+00> : vector<128xf32>
    %14 = vector.multi_reduction <add>, %13, %cst_9 [0] : vector<8x128xf32> to vector<128xf32>
    %15 = vector.shape_cast %14 : vector<128xf32> to vector<1x128xf32>
    %16 = vector.shape_cast %15 : vector<1x128xf32> to vector<1x1x128xf32>
    %17 = arith.addf %12, %16 : vector<1x1x128xf32>
    %c0_10 = arith.constant 0 : index
    %c0_11 = arith.constant 0 : index
    %c0_12 = arith.constant 0 : index
    %18 = vector.load %arg4[%c0_10, %c0_11, %c0_12] : memref<1x1x128xf32, #tpu.memory_space<vmem>>, vector<1x1x128xf32>
    tpu.vector_store %arg4[%c0_10, %c0_11, %c0_12], %17 {strides = array<i32>} : memref<1x1x128xf32, #tpu.memory_space<vmem>>, vector<1x1x128xf32>,
    %c0_13 = arith.constant 0 : index
    %c0_14 = arith.constant 0 : index
    %c0_15 = arith.constant 0 : index
    %19 = vector.load %arg5[%c0_13, %c0_14, %c0_15] : memref<1x1x128xf32, #tpu.memory_space<vmem>>, vector<1x1x128xf32>
    %20 = arith.addf %11, %6 : vector<8x128xf32>
    %cst_16 = arith.constant dense<0.000000e+00> : vector<128xf32>
    %21 = vector.multi_reduction <add>, %20, %cst_16 [0] : vector<8x128xf32> to vector<128xf32>
    %22 = vector.shape_cast %21 : vector<128xf32> to vector<1x128xf32>
    %23 = vector.shape_cast %22 : vector<1x128xf32> to vector<1x1x128xf32>
    %24 = arith.addf %19, %23 : vector<1x1x128xf32>
    %c0_17 = arith.constant 0 : index
    %c0_18 = arith.constant 0 : index
    %c0_19 = arith.constant 0 : index
    %25 = vector.load %arg5[%c0_17, %c0_18, %c0_19] : memref<1x1x128xf32, #tpu.memory_space<vmem>>, vector<1x1x128xf32>
    tpu.vector_store %arg5[%c0_17, %c0_18, %c0_19], %24 {strides = array<i32>} : memref<1x1x128xf32, #tpu.memory_space<vmem>>, vector<1x1x128xf32>,
    return
  }
  func.func @transform_0(%arg0: i32, %arg1: i32) -> (i32, i32, i32) {
    %c0_i32 = arith.constant 0 : i32
    %c0_i32_0 = arith.constant 0 : i32
    return %arg0, %arg1, %c0_i32 : i32, i32, i32
  }
  func.func @transform_1(%arg0: i32, %arg1: i32) -> (i32, i32, i32) {
    %c0_i32 = arith.constant 0 : i32
    %c0_i32_0 = arith.constant 0 : i32
    return %arg0, %arg1, %c0_i32 : i32, i32, i32
  }
  func.func @transform_2(%arg0: i32, %arg1: i32) -> (i32, i32, i32) {
    %c0_i32 = arith.constant 0 : i32
    %c0_i32_0 = arith.constant 0 : i32
    %c0_i32_1 = arith.constant 0 : i32
    return %arg0, %c0_i32, %c0_i32_0 : i32, i32, i32
  }
  func.func @transform_3(%arg0: i32, %arg1: i32) -> (i32, i32, i32) {
    %c0_i32 = arith.constant 0 : i32
    %c0_i32_0 = arith.constant 0 : i32
    %c0_i32_1 = arith.constant 0 : i32
    return %arg0, %c0_i32, %c0_i32_0 : i32, i32, i32
  }
}

</mosaic_0001>

<llo_original>
// kernel: dice_loss.1
$region0: #{dice_loss.1}
  #allocation0 [shape = 'u32[]', space=smem, size = 0x4, offset = 0x4, fixed_abs, tag = 'smem constant byte address 0x4 - core index']
  #allocation1 [shape = 'u32[72,128]{1,0:T(1,128)}', space=vmem, size = 0x9000, scoped, tag = 'internal scratch']
  %s0 = inlined_call_operand.vmem [shape: f32[2,8,128], index: 0, kind: input, shape index: {}]
  %s1 = inlined_call_operand.vmem [shape: f32[2,8,128], index: 1, kind: input, shape index: {}]
  %s2 = inlined_call_operand.vmem [shape: f32[2,1,128], index: 2, kind: output, shape index: {0}]
  %s3 = inlined_call_operand.vmem [shape: f32[2,1,128], index: 3, kind: output, shape index: {1}]
  %4 = xla_tuple %s2, %s3
  %s5 = sld [smem:[#allocation0]]
  $region53: #{dice_loss.1} parent=0
    _
  %s7 = ssub.s32 1, %s5
  %s8 = scalar_select 0, %s7, %s5
  loop: start=0, step=1, limit=4
  $region2: #{dice_loss.1} parent=0 // loop_pre_header
    _
  $region3: #{dice_loss.1} parent=0 // loop_header
    %s10 = sphi 0, %s14
    %p11 = scmp.ge.s32.totalorder %s10, 4
    %s17 = sphi 0, %s29
    %s18 = sphi 0, %s25
    %s19 = sphi 0, %s17
    %s20 = sphi 0, %s18
    %s21 = sphi 0, %s19
    %s22 = sphi 0, %s20
    %s34 = sphi 0, %s36
    %s37 = sphi 0, %s34
    %s38 = sphi 0, %s37
    %s54 = sphi 0, %s38
    %s62 = sphi 0, %s64
    %s65 = sphi 0, %s62
    %s66 = sphi 0, %s65
    %s82 = sphi 0, %s66
    %s88 = sphi 0, %s90
    %s91 = sphi 0, %s88
    %s92 = sphi 0, %s91
    %s108 = sphi 0, %s92
    %s114 = sphi 0, %s116
    %s117 = sphi 0, %s114
    %s118 = sphi 0, %s117
    %s134 = sphi 0, %s118
  $region4: #{dice_loss.1} parent=0 // loop_header_branch
    %13 = sbr.rel (%p11) target = $region8
  $region5: #{dice_loss.1} parent=0 // loop_body
    %s15 = ssub.s32 %s10, 1
    %s16 = ssub.s32 %s10, 2
    %s23 = sadd.s32 1, %s18
    %p24 = scmp.ge.s32.totalorder %s23, 1
    %s25 = scalar_select %p24, 0, %s23
    %s26 = sadd.s32 1, %s17
    %s27 = scalar_select %p24, %s26, %s17
    %p28 = scmp.ge.s32.totalorder %s27, 2
    %s29 = scalar_select %p28, 0, %s27
    %s30 = ssub.s32 %s17, %s29
    %s31 = ssub.s32 %s18, %s25
    %s32 = sor.u32 %s30, %s31
    %p33 = scmp.eq.s32.totalorder %s32, 0
    %s35 = sadd.s32 %s34, 1
    %s36 = scalar_select %p33, %s34, %s35
    %p39 = pneg %p33
    %p40 = scmp.eq.s32.totalorder %s10, 1
    %p41 = por %p39, %p40
    %p42 = scmp.ne.s32.totalorder %s34, %s37
    %p43 = scmp.eq.s32.totalorder %s10, 0
    %p44 = por %p42, %p43
    %p45 = scmp.ne.s32.totalorder %s34, %s37
    %p46 = scmp.eq.s32.totalorder %s15, 1
    %p47 = por %p45, %p46
    %p48 = scmp.ne.s32.totalorder %s37, %s38
    %p49 = scmp.eq.s32.totalorder %s15, 0
    %p50 = por %p48, %p49
    %p51 = scmp.ne.s32.totalorder %s37, %s38
    %p52 = scmp.eq.s32.totalorder %s16, 1
    %p53 = por %p51, %p52
    %p55 = scmp.ne.s32.totalorder %s38, %s54
    %p56 = scmp.eq.s32.totalorder %s16, 0
    %p57 = por %p55, %p56
    %s58 = ssub.s32 %s17, %s29
    %s59 = ssub.s32 %s18, %s25
    %s60 = sor.u32 %s58, %s59
    %p61 = scmp.eq.s32.totalorder %s60, 0
    %s63 = sadd.s32 %s62, 1
    %s64 = scalar_select %p61, %s62, %s63
    %p67 = pneg %p61
    %p68 = scmp.eq.s32.totalorder %s10, 1
    %p69 = por %p67, %p68
    %p70 = scmp.ne.s32.totalorder %s62, %s65
    %p71 = scmp.eq.s32.totalorder %s10, 0
    %p72 = por %p70, %p71
    %p73 = scmp.ne.s32.totalorder %s62, %s65
    %p74 = scmp.eq.s32.totalorder %s15, 1
    %p75 = por %p73, %p74
    %p76 = scmp.ne.s32.totalorder %s65, %s66
    %p77 = scmp.eq.s32.totalorder %s15, 0
    %p78 = por %p76, %p77
    %p79 = scmp.ne.s32.totalorder %s65, %s66
    %p80 = scmp.eq.s32.totalorder %s16, 1
    %p81 = por %p79, %p80
    %p83 = scmp.ne.s32.totalorder %s66, %s82
    %p84 = scmp.eq.s32.totalorder %s16, 0
    %p85 = por %p83, %p84
    %s86 = ssub.s32 %s17, %s29
    %p87 = scmp.eq.s32.totalorder %s86, 0
    %s89 = sadd.s32 %s88, 1
    %s90 = scalar_select %p87, %s88, %s89
    %p93 = pneg %p87
    %p94 = scmp.eq.s32.totalorder %s10, 1
    %p95 = por %p93, %p94
    %p96 = scmp.ne.s32.totalorder %s88, %s91
    %p97 = scmp.eq.s32.totalorder %s10, 0
    %p98 = por %p96, %p97
    %p99 = scmp.ne.s32.totalorder %s88, %s91
    %p100 = scmp.eq.s32.totalorder %s15, 1
    %p101 = por %p99, %p100
    %p102 = scmp.ne.s32.totalorder %s91, %s92
    %p103 = scmp.eq.s32.totalorder %s15, 0
    %p104 = por %p102, %p103
    %p105 = scmp.ne.s32.totalorder %s91, %s92
    %p106 = scmp.eq.s32.totalorder %s16, 1
    %p107 = por %p105, %p106
    %p109 = scmp.ne.s32.totalorder %s92, %s108
    %p110 = scmp.eq.s32.totalorder %s16, 0
    %p111 = por %p109, %p110
    %s112 = ssub.s32 %s17, %s29
    %p113 = scmp.eq.s32.totalorder %s112, 0
    %s115 = sadd.s32 %s114, 1
    %s116 = scalar_select %p113, %s114, %s115
    %p119 = pneg %p113
    %p120 = scmp.eq.s32.totalorder %s10, 1
    %p121 = por %p119, %p120
    %p122 = scmp.ne.s32.totalorder %s114, %s117
    %p123 = scmp.eq.s32.totalorder %s10, 0
    %p124 = por %p122, %p123
    %p125 = scmp.ne.s32.totalorder %s114, %s117
    %p126 = scmp.eq.s32.totalorder %s15, 1
    %p127 = por %p125, %p126
    %p128 = scmp.ne.s32.totalorder %s117, %s118
    %p129 = scmp.eq.s32.totalorder %s15, 0
    %p130 = por %p128, %p129
    %p131 = scmp.ne.s32.totalorder %s117, %s118
    %p132 = scmp.eq.s32.totalorder %s16, 1
    %p133 = por %p131, %p132
    %p135 = scmp.ne.s32.totalorder %s118, %s134
    %p136 = scmp.eq.s32.totalorder %s16, 0
    %p137 = por %p135, %p136
    %p138 = scmp.le.s32.totalorder 1, %s10
    %p139 = scmp.lt.s32.totalorder %s10, 3
    %p140 = pnand %p138, %p139
    %p141 = pneg %p140
    // Predicated region
    $region9: #{dice_loss.1} parent=5 // pred_check
      _
    $region10: #{dice_loss.1} parent=5 // pred_check_branch
      %143 = sbr.rel (%p140) target = $region12
    $region11: #{dice_loss.1} parent=5 // pred_region
      %s144 = ssub.s32 %s10, 1
    $region12: #{dice_loss.1} parent=5 // pred_fallthru
      _
    %p145 = scmp.lt.s32.totalorder %s10, 2
    // Predicated region
    $region13: #{dice_loss.1} parent=5 // pred_check
      %p146 = pneg %p145
    $region14: #{dice_loss.1} parent=5 // pred_check_branch
      %148 = sbr.rel (%p146) target = $region16
    $region15: #{dice_loss.1} parent=5 // pred_region
      // Predicated region
      $region17: #{dice_loss.1} parent=15 // pred_check
        %p149 = pneg %p44
      $region18: #{dice_loss.1} parent=15 // pred_check_branch
        %151 = sbr.rel (%p149) target = $region20
      $region19: #{dice_loss.1} parent=15 // pred_region
        %p152 = scmp.lt.s32.totalorder %s17, 1
        %s153 = scalar_select %p152, %s17, 1
        %p154 = scmp.lt.s32.totalorder %s18, 0
        %s155 = scalar_select %p154, %s18, 0
        %s156 = sadd.s32 %s155, %s153
        %s157 = smul.addr %s156, 8
        %s158 = scalar_lea.vmem %s0, %s157
      $region20: #{dice_loss.1} parent=15 // pred_fallthru
        _
      // Predicated region
      $region21: #{dice_loss.1} parent=15 // pred_check
        %p159 = pneg %p72
      $region22: #{dice_loss.1} parent=15 // pred_check_branch
        %161 = sbr.rel (%p159) target = $region24
      $region23: #{dice_loss.1} parent=15 // pred_region
        %p162 = scmp.lt.s32.totalorder %s17, 1
        %s163 = scalar_select %p162, %s17, 1
        %p164 = scmp.lt.s32.totalorder %s18, 0
        %s165 = scalar_select %p164, %s18, 0
        %s166 = sadd.s32 %s165, %s163
        %s167 = smul.addr %s166, 8
        %s168 = scalar_lea.vmem %s1, %s167
      $region24: #{dice_loss.1} parent=15 // pred_fallthru
        _
    $region16: #{dice_loss.1} parent=5 // pred_fallthru
      _
    %p169 = scmp.le.s32.totalorder 1, %s10
    %p170 = scmp.lt.s32.totalorder %s10, 3
    %p171 = pnand %p169, %p170
    %p172 = pneg %p171
    // Predicated region
    $region25: #{dice_loss.1} parent=5 // pred_check
      _
    $region26: #{dice_loss.1} parent=5 // pred_check_branch
      %174 = sbr.rel (%p171) target = $region28
    $region27: #{dice_loss.1} parent=5 // pred_region
      %s175 = ssub.s32 %s10, 1
      %p176 = scmp.lt.s32.totalorder %s19, 1
      %s177 = scalar_select %p176, %s19, 1
      %p178 = scmp.lt.s32.totalorder %s20, 0
      %s179 = scalar_select %p178, %s20, 0
      %s180 = sadd.s32 %s179, %s177
      %s181 = smul.addr %s180, 8
      %s182 = scalar_lea.vmem %s0, %s181
      %p183 = pneg %p50
      %p184 = pneg %p47
      %p185 = scmp.lt.s32.totalorder %s19, 1
      %s186 = scalar_select %p185, %s19, 1
      %p187 = scmp.lt.s32.totalorder %s20, 0
      %s188 = scalar_select %p187, %s20, 0
      %s189 = sadd.s32 %s188, %s186
      %s190 = smul.addr %s189, 8
      %s191 = scalar_lea.vmem %s1, %s190
      %p192 = pneg %p78
      %p193 = pneg %p75
      %p194 = pneg %p104
      %p195 = pneg %p101
      %p196 = scmp.lt.s32.totalorder %s19, 1
      %s197 = scalar_select %p196, %s19, 1
      %s198 = scalar_lea.vmem %s2, %s197
      %p199 = pneg %p130
      %p200 = pneg %p127
      %p201 = scmp.lt.s32.totalorder %s19, 1
      %s202 = scalar_select %p201, %s19, 1
      %s203 = scalar_lea.vmem %s3, %s202
      %p204 = scmp.lt.s32.totalorder %s19, 1
      %s205 = scalar_select %p204, %s19, 1
      %p206 = scmp.lt.s32.totalorder %s20, 0
      %s207 = scalar_select %p206, %s20, 0
      %s208 = sadd.s32 %s207, %s205
      %s209 = smul.addr %s208, 8
      %s210 = scalar_lea.vmem %s0, %s209
      %p211 = scmp.lt.s32.totalorder %s19, 1
      %s212 = scalar_select %p211, %s19, 1
      %p213 = scmp.lt.s32.totalorder %s20, 0
      %s214 = scalar_select %p213, %s20, 0
      %s215 = sadd.s32 %s214, %s212
      %s216 = smul.addr %s215, 8
      %s217 = scalar_lea.vmem %s1, %s216
      %p218 = scmp.lt.s32.totalorder %s19, 1
      %s219 = scalar_select %p218, %s19, 1
      %s220 = scalar_lea.vmem %s2, %s219
      %p221 = scmp.lt.s32.totalorder %s19, 1
      %s222 = scalar_select %p221, %s19, 1
      %s223 = scalar_lea.vmem %s3, %s222
      %p224 = scmp.eq.s32.totalorder %s20, 0
      // Predicated region
      $region29: #{dice_loss.1} parent=27 // pred_check
        %p225 = pneg %p224
      $region30: #{dice_loss.1} parent=27 // pred_check_branch
        %227 = sbr.rel (%p225) target = $region32
      $region31: #{dice_loss.1} parent=27 // pred_region
        %228 = vst [vmem:[%s220] sm:$0x1] 0.0
        %229 = vst [vmem:[%s223] sm:$0x1] 0.0
      $region32: #{dice_loss.1} parent=27 // pred_fallthru
        _
      %v230 = vld [vmem:[%s210] sm:$0xff]
      %v231 = vld [vmem:[%s217] sm:$0xff]
      %v232 = vxor.u32 %v230, 2147483648
      %v233 = vmul.f32 %v232, 1.442695
      %v234 = vpow.pop %v233
      %v235 = vadd.f32 %v234, 1.0
      %v236 = vrcp.pop %v235
      %v237 = vmul.f32 %v235, %v236
      %v238 = vsub.f32 1.0, %v237
      %v239 = vmul.f32 %v236, %v238
      %v240 = vadd.f32 %v236, %v239
      %vm241 = vweird.f32 %v235
      %vm242 = vweird.f32 %v236
      %vm243 = vmor %vm241, %vm242
      %v244 = vsel %vm243, %v236, %v240
      %v245 = vand.u32 2147483647, %v235
      %vm246 = vcmp.eq.f32.partialorder %v245, 8.507059e+37
      %v247 = vand.u32 %v235, 2147483648
      %v248 = vor.u32 1.1754944e-38, %v247
      %v249 = vsel %vm246, %v248, %v244
      %v250 = vmul.f32 1.0, %v249
      %v251 = vld [vmem:[%s220] sm:$0x1]
      %v252 = vmul.f32 %v250, %v231
      %v253 = vrot.slane %v252, 4
      %v254 = vadd.f32 %v252, %v253
      %v255 = vrot.slane %v254, 2
      %v256 = vadd.f32 %v254, %v255
      %v257 = vrot.slane %v256, 1
      %v258 = vadd.f32 %v256, %v257
      %v259 = vadd.f32 %v251, %v258
      %260 = vst [vmem:[%s220] sm:$0x1] %v259
      %v261 = vld [vmem:[%s223] sm:$0x1]
      %v262 = vadd.f32 %v250, %v231
      %v263 = vrot.slane %v262, 4
      %v264 = vadd.f32 %v262, %v263
      %v265 = vrot.slane %v264, 2
      %v266 = vadd.f32 %v264, %v265
      %v267 = vrot.slane %v266, 1
      %v268 = vadd.f32 %v266, %v267
      %v269 = vadd.f32 %v261, %v268
      %270 = vst [vmem:[%s223] sm:$0x1] %v269
      %p271 = scmp.lt.s32.totalorder %s19, 1
      %s272 = scalar_select %p271, %s19, 1
      %s273 = scalar_lea.vmem %s2, %s272
      %p274 = scmp.lt.s32.totalorder %s19, 1
      %s275 = scalar_select %p274, %s19, 1
      %s276 = scalar_lea.vmem %s3, %s275
      // Predicated region
      $region33: #{dice_loss.1} parent=27 // pred_check
        %p277 = pneg %p101
      $region34: #{dice_loss.1} parent=27 // pred_check_branch
        %279 = sbr.rel (%p277) target = $region36
      $region35: #{dice_loss.1} parent=27 // pred_region
        _
      $region36: #{dice_loss.1} parent=27 // pred_fallthru
        _
      // Predicated region
      $region37: #{dice_loss.1} parent=27 // pred_check
        %p280 = pneg %p127
      $region38: #{dice_loss.1} parent=27 // pred_check_branch
        %282 = sbr.rel (%p280) target = $region40
      $region39: #{dice_loss.1} parent=27 // pred_region
        _
      $region40: #{dice_loss.1} parent=27 // pred_fallthru
        _
    $region28: #{dice_loss.1} parent=5 // pred_fallthru
      _
    %p283 = scmp.le.s32.totalorder 2, %s10
    // Predicated region
    $region41: #{dice_loss.1} parent=5 // pred_check
      %p284 = pneg %p283
    $region42: #{dice_loss.1} parent=5 // pred_check_branch
      %286 = sbr.rel (%p284) target = $region44
    $region43: #{dice_loss.1} parent=5 // pred_region
      %s287 = ssub.s32 %s10, 2
      // Predicated region
      $region45: #{dice_loss.1} parent=43 // pred_check
        %p288 = pneg %p107
      $region46: #{dice_loss.1} parent=43 // pred_check_branch
        %290 = sbr.rel (%p288) target = $region48
      $region47: #{dice_loss.1} parent=43 // pred_region
        %p291 = scmp.lt.s32.totalorder %s21, 1
        %s292 = scalar_select %p291, %s21, 1
        %s293 = scalar_lea.vmem %s2, %s292
      $region48: #{dice_loss.1} parent=43 // pred_fallthru
        _
      // Predicated region
      $region49: #{dice_loss.1} parent=43 // pred_check
        %p294 = pneg %p133
      $region50: #{dice_loss.1} parent=43 // pred_check_branch
        %296 = sbr.rel (%p294) target = $region52
      $region51: #{dice_loss.1} parent=43 // pred_region
        %p297 = scmp.lt.s32.totalorder %s21, 1
        %s298 = scalar_select %p297, %s21, 1
        %s299 = scalar_lea.vmem %s3, %s298
      $region52: #{dice_loss.1} parent=43 // pred_fallthru
        _
    $region44: #{dice_loss.1} parent=5 // pred_fallthru
      _
  $region6: #{dice_loss.1} parent=0 // loop_footer
    %s14 = sadd.s32 1, %s10
  $region7: #{dice_loss.1} parent=0 // loop_footer_branch
    %9 = sbr.rel target = $region3
  $region8: #{dice_loss.1} parent=0 // loop_exit
    _

</llo_original>
